<compile_context>
chip_gen: v7x
topology: tpu7x:2x2x1
jax: 0.10.0
libtpu: 0.0.40
codegen_flags: <defaults>
</compile_context>

<pallas_src>
import jax
import jax.numpy as jnp
from jax.experimental import pallas as pl
from jax.experimental.pallas import tpu as pltpu

LN_EPS = 1e-5


# --------------------------------------------------------------------------- #
# Kernel
# --------------------------------------------------------------------------- #
def _build_kernel(tn, d, chunk):
    """Kernel over one (batch, N-tile) block: x (tn, d) -> out (tn, d).

    The N-tile is walked in `chunk`-row slabs so fp32 temporaries stay small
    (~<= 1 MiB each) regardless of the (large) HBM<->VMEM block size.
    """
    n_full = tn // chunk
    tail = tn - n_full * chunk
    inv_d = 1.0 / d

    def _ln_mod(x_slab, scale1p, shift, out_dtype):
        xs = x_slab.astype(jnp.float32)                                # (rows, d)
        mean = jnp.sum(xs, axis=-1, keepdims=True) * inv_d
        dlt = xs - mean                                                # reused below
        var = jnp.sum(dlt * dlt, axis=-1, keepdims=True) * inv_d       # two-pass var
        rstd = jax.lax.rsqrt(var + LN_EPS)
        # out = (x - mean) * rstd * (1 + scale) + shift, fused as dlt * a + shift
        return (dlt * (rstd * scale1p) + shift).astype(out_dtype)

    def kernel(mod_ref, x_ref, o_ref):
        # mod_ref: (2, d) f32, resident across the N-tile grid axis.
        mod = mod_ref[...]
        scale1p = mod[0:1, :]          # 1 + scale  (precomputed in the wrapper)
        shift = mod[1:2, :]            # shift

        def body(i, carry):
            r0 = pl.multiple_of(i * chunk, chunk)
            xs = x_ref[pl.ds(r0, chunk), :]
            o_ref[pl.ds(r0, chunk), :] = _ln_mod(xs, scale1p, shift, o_ref.dtype)
            return carry

        jax.lax.fori_loop(0, n_full, body, 0)

        if tail > 0:                                   # static remainder slab
            r0 = n_full * chunk
            xs = x_ref[pl.ds(r0, tail), :]
            o_ref[pl.ds(r0, tail), :] = _ln_mod(xs, scale1p, shift, o_ref.dtype)

    return kernel


# --------------------------------------------------------------------------- #
# Tiling helpers
# --------------------------------------------------------------------------- #
def _sublane_pack(itemsize):
    # Sub-32-bit dtypes pack along sublanes: 16 rows for bf16, 32 for int8/fp8.
    return {4: 8, 2: 16, 1: 32}.get(int(itemsize), 8)


def _vmem_capacity_bytes():
    try:
        return int(pltpu.get_tpu_info().vmem_capacity_bytes)
    except Exception:
        return 64 << 20            # conservative default (v7x per-TensorCore VMEM)


def _pick_tn(N, row_bytes, target_bytes, pack):
    if N * row_bytes <= target_bytes:
        return N                                   # full-extent block (always legal)
    tn_max = max(pack, ((target_bytes // row_bytes) // pack) * pack)
    # Prefer a TN that divides N (no padded / NaN-prone tail tile) as long as
    # it is not much smaller than the byte target.
    t = tn_max
    while t >= max(pack, tn_max // 2):
        if N % t == 0:
            return t
        t -= pack
    return tn_max


def _pick_chunk(tn, d, pack, target_bytes=1 << 20):
    c = max(pack, ((target_bytes // (d * 4)) // pack) * pack)
    return min(tn, c)


# --------------------------------------------------------------------------- #
# Wrapper
# --------------------------------------------------------------------------- #
def _adaln_jax(x, scale, shift):
    """XLA fallback path (used when D is not lane-dense)."""
    xf = x.astype(jnp.float32)
    mean = jnp.mean(xf, axis=-1, keepdims=True)
    var = jnp.mean(jnp.square(xf - mean), axis=-1, keepdims=True)
    xn = (xf - mean) * jax.lax.rsqrt(var + LN_EPS)
    out = xn * (1.0 + scale[:, None, :]) + shift[:, None, :]
    return out.astype(x.dtype)


def final_adaln(x, cond, w, b, *, tn=None):
    """FinalAdaLN forward.

    x: (B, N, D); cond: (B, C); w: (C, 2D) (nn.Linear weight pre-transposed);
    b: (2D,). Returns (B, N, D) in x.dtype.
    """
    B, N, D = x.shape

    # --- conditioning path (hoisted): ada = silu(cond) @ W + b, one XLA matmul ---
    c = cond.astype(jnp.float32)
    c = c * jax.nn.sigmoid(c)                       # SiLU
    ada = jnp.dot(c, w.astype(jnp.float32),
                  preferred_element_type=jnp.float32) + b.astype(jnp.float32)
    scale, shift = ada[:, :D], ada[:, D:]           # chunk(2, dim=-1) order

    if D % 128 != 0:
        # Non-lane-dense feature dim: masked partial stores would dominate the
        # Pallas kernel; let XLA fuse this (tiny) case instead.
        return _adaln_jax(x, scale, shift)

    # Fused modulation operand: row 0 = 1 + scale, row 1 = shift (f32).
    mod = jnp.stack([1.0 + scale, shift], axis=1)   # (B, 2, D)

    itemsize = jnp.dtype(x.dtype).itemsize
    pack = _sublane_pack(itemsize)
    row_bytes = D * itemsize

    # --- per-generation VMEM budget (v5e/v6e: 128 MiB, v7x: 64 MiB) ---
    vmem_cap = _vmem_capacity_bytes()
    usable = (vmem_cap * 3) // 4                    # headroom for compiler scratch
    target_blk = min(16 << 20, usable // 6)         # 4x double-buffered in/out blocks
    # Hard cap on rows so double-buffered in+out blocks always fit the budget.
    hard_cap = max(pack, (((usable - (8 << 20)) // (4 * row_bytes)) // pack) * pack)

    if tn is None:
        tn = _pick_tn(N, row_bytes, target_blk, pack)
    tn = min(int(tn), N)
    if tn > hard_cap:
        tn = min(hard_cap, N)                       # clamp TN itself, never OOM VMEM
    num_n = pl.cdiv(N, tn)

    # v7x has 2 TensorCores: make sure the parallel grid has >= 2 units of work.
    if B * num_n < 2 and N >= 2 * pack:
        tn = max(pack, (pl.cdiv(N, 2) // pack) * pack)
        num_n = pl.cdiv(N, tn)

    chunk = _pick_chunk(tn, D, pack)

    blk_bytes = tn * row_bytes
    temp_bytes = 4 * chunk * D * 4                  # in-kernel fp32 chunk temporaries
    mod_bytes = 2 * 2 * D * 4                       # double-buffered (2, D) mod block
    needed = 4 * blk_bytes + temp_bytes + mod_bytes + (2 << 20)
    vmem_limit = int(min(usable, max(32 << 20, needed)))

    kernel = _build_kernel(tn, D, chunk)
    return pl.pallas_call(
        kernel,
        out_shape=jax.ShapeDtypeStruct((B, N, D), x.dtype),
        grid_spec=pltpu.PrefetchScalarGridSpec(
            num_scalar_prefetch=0,
            grid=(B, num_n),
            in_specs=[
                # mod is resident across the N-tile axis (same block idx for all ni)
                pl.BlockSpec((None, 2, D), lambda bi, ni: (bi, 0, 0)),
                pl.BlockSpec((None, tn, D), lambda bi, ni: (bi, ni, 0)),
            ],
            out_specs=pl.BlockSpec((None, tn, D), lambda bi, ni: (bi, ni, 0)),
        ),
        compiler_params=pltpu.CompilerParams(
            dimension_semantics=("parallel", "parallel"),
            vmem_limit_bytes=vmem_limit,
        ),
    )(mod, x)


# --------------------------------------------------------------------------- #
# Pure-JAX reference (mirrors the PyTorch forward)
# --------------------------------------------------------------------------- #
def final_adaln_ref(x, cond, w, b):
    D = x.shape[-1]
    c = cond.astype(jnp.float32)
    c = c * jax.nn.sigmoid(c)
    ada = jnp.dot(c, w.astype(jnp.float32),
                  preferred_element_type=jnp.float32) + b.astype(jnp.float32)
    scale, shift = ada[:, :D], ada[:, D:]
    xf = x.astype(jnp.float32)
    mean = jnp.mean(xf, axis=-1, keepdims=True)
    var = jnp.mean(jnp.square(xf - mean), axis=-1, keepdims=True)
    xn = (xf - mean) * jax.lax.rsqrt(var + LN_EPS)
    return xn * (1.0 + scale[:, None, :]) + shift[:, None, :]


# --------------------------------------------------------------------------- #
# Tests
# --------------------------------------------------------------------------- #
def _run_case(key, B, N, D, C, dtype=jnp.float32, tn=None, atol=1e-4, rtol=1e-4):
    kx, kc, kw, kb = jax.random.split(key, 4)
    x = jax.random.normal(kx, (B, N, D), dtype=jnp.float32).astype(dtype)
    cond = jax.random.normal(kc, (B, C), dtype=jnp.float32)
    # nn.Linear(C, 2D) weight (2D, C), bias (2D,); stored pre-transposed (C, 2D).
    w = jax.random.normal(kw, (C, 2 * D), dtype=jnp.float32) / jnp.sqrt(C)
    b = jax.random.normal(kb, (2 * D,), dtype=jnp.float32) * 0.01

    out = final_adaln(x, cond, w, b, tn=tn)
    out = jax.block_until_ready(out)

    ref = final_adaln_ref(x, cond, w, b)
    assert out.shape == (B, N, D)
    assert out.dtype == dtype
    err = jnp.max(jnp.abs(out.astype(jnp.float32) - ref))
    assert jnp.allclose(out.astype(jnp.float32), ref, atol=atol, rtol=rtol), (
        f"mismatch vs reference: max abs err {err}")


if __name__ == "__main__":
    key = jax.random.PRNGKey(0)
    k1, k2, k3, k4 = jax.random.split(key, 4)

    # Small shapes consistent with the module (lane-dense feature dim).
    _run_case(k1, B=2, N=8, D=128, C=16)

    # B == 1 forces the v7x grid-split; large N exercises the in-kernel chunk loop
    # and a multi-tile N axis.
    _run_case(k2, B=1, N=4096, D=512, C=64)

    # bf16 input: exercises the 16-row sublane packing and mixed-precision path.
    _run_case(k3, B=2, N=256, D=256, C=32, dtype=jnp.bfloat16, atol=5e-2, rtol=5e-2)

    # Tiny non-lane-dense D (the module's smallest config) takes the XLA fallback.
    _run_case(k4, B=2, N=8, D=32, C=16)

    print("KERNEL_OK")
</pallas_src>

<mosaic_0001>
module attributes {stable_mosaic.version = 11 : i64} {
  func.func @kernel(%arg0: i32, %arg1: i32, %arg2: memref<1x2x128xf32, #tpu.memory_space<vmem>>, %arg3: memref<1x8x128xf32, #tpu.memory_space<vmem>>, %arg4: memref<1x8x128xf32, #tpu.memory_space<vmem>>) attributes {dimension_semantics = [#tpu.dimension_semantics<parallel>, #tpu.dimension_semantics<parallel>], iteration_bounds = array<i64: 2, 1>, scalar_prefetch = 0 : i64, scratch_operands = 0 : i64, tpu.core_type = #tpu.core_type<tc>, window_params = [{transform_indices = @transform_0, window_bounds = array<i64: 1, 2, 128>}, {transform_indices = @transform_1, window_bounds = array<i64: 1, 8, 128>}, {transform_indices = @transform_2, window_bounds = array<i64: 1, 8, 128>}]} {
    %c0 = arith.constant 0 : index
    %c0_0 = arith.constant 0 : index
    %c0_1 = arith.constant 0 : index
    %0 = vector.load %arg2[%c0, %c0_0, %c0_1] : memref<1x2x128xf32, #tpu.memory_space<vmem>>, vector<1x2x128xf32>
    %1 = vector.shape_cast %0 : vector<1x2x128xf32> to vector<2x128xf32>
    %2 = vector.extract_strided_slice %1 {offsets = [0, 0], sizes = [1, 128], strides = [1, 1]} : vector<2x128xf32> to vector<1x128xf32>
    %3 = vector.extract_strided_slice %1 {offsets = [1, 0], sizes = [1, 128], strides = [1, 1]} : vector<2x128xf32> to vector<1x128xf32>
    %c0_i32 = arith.constant 0 : i32
    %c8_i32 = arith.constant 8 : i32
    %4 = arith.muli %c0_i32, %c8_i32 : i32
    %5 = tpu.assume_multiple %4, 8 : i32
    %c0_2 = arith.constant 0 : index
    %6 = arith.index_cast %5 : i32 to index
    %c0_3 = arith.constant 0 : index
    %7 = vector.load %arg3[%c0_2, %6, %c0_3] : memref<1x8x128xf32, #tpu.memory_space<vmem>>, vector<1x8x128xf32>
    %8 = vector.shape_cast %7 : vector<1x8x128xf32> to vector<8x128xf32>
    %cst = arith.constant dense<0.000000e+00> : vector<8xf32>
    %9 = vector.multi_reduction <add>, %8, %cst [1] : vector<8x128xf32> to vector<8xf32>
    %10 = vector.shape_cast %9 : vector<8xf32> to vector<8x1xf32>
    %cst_4 = arith.constant 7.812500e-03 : f32
    %11 = vector.broadcast %cst_4 : f32 to vector<8x1xf32>
    %12 = arith.mulf %10, %11 : vector<8x1xf32>
    %13 = vector.broadcast %12 : vector<8x1xf32> to vector<8x128xf32>
    %14 = arith.subf %8, %13 : vector<8x128xf32>
    %15 = arith.mulf %14, %14 : vector<8x128xf32>
    %cst_5 = arith.constant dense<0.000000e+00> : vector<8xf32>
    %16 = vector.multi_reduction <add>, %15, %cst_5 [1] : vector<8x128xf32> to vector<8xf32>
    %17 = vector.shape_cast %16 : vector<8xf32> to vector<8x1xf32>
    %cst_6 = arith.constant 7.812500e-03 : f32
    %18 = vector.broadcast %cst_6 : f32 to vector<8x1xf32>
    %19 = arith.mulf %17, %18 : vector<8x1xf32>
    %cst_7 = arith.constant 9.99999974E-6 : f32
    %20 = vector.broadcast %cst_7 : f32 to vector<8x1xf32>
    %21 = arith.addf %19, %20 : vector<8x1xf32>
    %22 = math.rsqrt %21 : vector<8x1xf32>
    %23 = vector.broadcast %22 : vector<8x1xf32> to vector<8x128xf32>
    %24 = vector.broadcast %2 : vector<1x128xf32> to vector<8x128xf32>
    %25 = arith.mulf %23, %24 : vector<8x128xf32>
    %26 = arith.mulf %14, %25 : vector<8x128xf32>
    %27 = vector.broadcast %3 : vector<1x128xf32> to vector<8x128xf32>
    %28 = arith.addf %26, %27 : vector<8x128xf32>
    %c0_8 = arith.constant 0 : index
    %29 = arith.index_cast %5 : i32 to index
    %c0_9 = arith.constant 0 : index
    %30 = vector.load %arg4[%c0_8, %29, %c0_9] : memref<1x8x128xf32, #tpu.memory_space<vmem>>, vector<1x8x128xf32>
    %31 = vector.shape_cast %30 : vector<1x8x128xf32> to vector<8x128xf32>
    %32 = vector.shape_cast %28 : vector<8x128xf32> to vector<1x8x128xf32>
    tpu.vector_store %arg4[%c0_8, %29, %c0_9], %32 {strides = array<i32>} : memref<1x8x128xf32, #tpu.memory_space<vmem>>, vector<1x8x128xf32>,
    %c1_i32 = arith.constant 1 : i32
    return
  }
  func.func @transform_0(%arg0: i32, %arg1: i32) -> (i32, i32, i32) {
    %c0_i32 = arith.constant 0 : i32
    %c0_i32_0 = arith.constant 0 : i32
    %c0_i32_1 = arith.constant 0 : i32
    return %arg0, %c0_i32, %c0_i32_0 : i32, i32, i32
  }
  func.func @transform_1(%arg0: i32, %arg1: i32) -> (i32, i32, i32) {
    %c0_i32 = arith.constant 0 : i32
    %c0_i32_0 = arith.constant 0 : i32
    return %arg0, %arg1, %c0_i32 : i32, i32, i32
  }
  func.func @transform_2(%arg0: i32, %arg1: i32) -> (i32, i32, i32) {
    %c0_i32 = arith.constant 0 : i32
    %c0_i32_0 = arith.constant 0 : i32
    return %arg0, %arg1, %c0_i32 : i32, i32, i32
  }
}

</mosaic_0001>

<llo_original>
// kernel: tpu_custom_call.1
$region0: #{tpu_custom_call.1}
  #allocation0 [shape = 'u32[]', space=smem, size = 0x4, offset = 0x4, fixed_abs, tag = 'smem constant byte address 0x4 - core index']
  #allocation1 [shape = 'u32[144,128]{1,0:T(1,128)}', space=vmem, size = 0x12000, scoped, tag = 'internal scratch']
  %s0 = inlined_call_operand.hbm [shape: f32[2,2,128], index: 0, kind: input, shape index: {}]
  %s1 = inlined_call_operand.hbm [shape: f32[2,8,128], index: 1, kind: input, shape index: {}]
  %s2 = inlined_call_operand.hbm [shape: f32[2,8,128], index: 2, kind: output, shape index: {}]
  %s3 = sld [smem:[#allocation0]]
  $region49: #{tpu_custom_call.1} parent=0
    _
  %s5 = ssub.s32 1, %s3
  %s6 = scalar_select 0, %s5, %s3
  $region1: #{tpu_custom_call.1} parent=0
    #allocation2 [shape = 'u8[2048]{0}', space=vmem, size = 0x800, scoped, tag = 'input window, operand 0']
    #allocation3 [shape = 's32[2]{0}', space=sflag, size = 0x8, scoped, tag = 'scoped memory for tpu_custom_call.1']
    #allocation4 [shape = 's32[2]{0}', space=sflag, size = 0x8, scoped, tag = 'scoped memory for tpu_custom_call.1']
    #allocation5 [shape = 'u8[8192]{0}', space=vmem, size = 0x2000, scoped, tag = 'input window, operand 1']
    #allocation6 [shape = 's32[2]{0}', space=sflag, size = 0x8, scoped, tag = 'scoped memory for tpu_custom_call.1']
    #allocation7 [shape = 'u8[8192]{0}', space=vmem, size = 0x2000, scoped, tag = 'output window, operand 0']
    %7 = vsyncpa [#allocation3], 0
    %s8 = scalar_lea.sflag [#allocation3], 1
    %9 = vsyncpa %s8, 0
    %10 = vsyncpa [#allocation6], 0
    %s11 = scalar_lea.sflag [#allocation6], 1
    %12 = vsyncpa %s11, 0
    %13 = vsyncpa [#allocation4], 0
    %s14 = scalar_lea.sflag [#allocation4], 1
    %15 = vsyncpa %s14, 0
    loop: start=0, step=1, limit=4
    $region2: #{tpu_custom_call.1} parent=1 // loop_pre_header
      _
    $region3: #{tpu_custom_call.1} parent=1 // loop_header
      %s17 = sphi 0, %s21
      %p18 = scmp.ge.s32.totalorder %s17, 4
      %s24 = sphi 0, %s36
      %s25 = sphi 0, %s32
      %s26 = sphi 0, %s24
      %s27 = sphi 0, %s25
      %s28 = sphi 0, %s26
      %s29 = sphi 0, %s27
      %s39 = sphi 0, %s41
      %s42 = sphi 0, %s39
      %s43 = sphi 0, %s42
      %s59 = sphi 0, %s43
      %s67 = sphi 0, %s69
      %s70 = sphi 0, %s67
      %s71 = sphi 0, %s70
      %s87 = sphi 0, %s71
      %s95 = sphi 0, %s97
      %s98 = sphi 0, %s95
      %s99 = sphi 0, %s98
      %s115 = sphi 0, %s99
    $region4: #{tpu_custom_call.1} parent=1 // loop_header_branch
      %20 = sbr.rel (%p18) target = $region8
    $region5: #{tpu_custom_call.1} parent=1 // loop_body
      %s22 = ssub.s32 %s17, 1
      %s23 = ssub.s32 %s17, 2
      %s30 = sadd.s32 1, %s25
      %p31 = scmp.ge.s32.totalorder %s30, 1
      %s32 = scalar_select %p31, 0, %s30
      %s33 = sadd.s32 1, %s24
      %s34 = scalar_select %p31, %s33, %s24
      %p35 = scmp.ge.s32.totalorder %s34, 2
      %s36 = scalar_select %p35, 0, %s34
      %s37 = ssub.s32 %s24, %s36
      %p38 = scmp.eq.s32.totalorder %s37, 0
      %s40 = sadd.s32 %s39, 1
      %s41 = scalar_select %p38, %s39, %s40
      %p44 = pneg %p38
      %p45 = scmp.eq.s32.totalorder %s17, 1
      %p46 = por %p44, %p45
      %p47 = scmp.ne.s32.totalorder %s39, %s42
      %p48 = scmp.eq.s32.totalorder %s17, 0
      %p49 = por %p47, %p48
      %p50 = scmp.ne.s32.totalorder %s39, %s42
      %p51 = scmp.eq.s32.totalorder %s22, 1
      %p52 = por %p50, %p51
      %p53 = scmp.ne.s32.totalorder %s42, %s43
      %p54 = scmp.eq.s32.totalorder %s22, 0
      %p55 = por %p53, %p54
      %p56 = scmp.ne.s32.totalorder %s42, %s43
      %p57 = scmp.eq.s32.totalorder %s23, 1
      %p58 = por %p56, %p57
      %p60 = scmp.ne.s32.totalorder %s43, %s59
      %p61 = scmp.eq.s32.totalorder %s23, 0
      %p62 = por %p60, %p61
      %s63 = ssub.s32 %s24, %s36
      %s64 = ssub.s32 %s25, %s32
      %s65 = sor.u32 %s63, %s64
      %p66 = scmp.eq.s32.totalorder %s65, 0
      %s68 = sadd.s32 %s67, 1
      %s69 = scalar_select %p66, %s67, %s68
      %p72 = pneg %p66
      %p73 = scmp.eq.s32.totalorder %s17, 1
      %p74 = por %p72, %p73
      %p75 = scmp.ne.s32.totalorder %s67, %s70
      %p76 = scmp.eq.s32.totalorder %s17, 0
      %p77 = por %p75, %p76
      %p78 = scmp.ne.s32.totalorder %s67, %s70
      %p79 = scmp.eq.s32.totalorder %s22, 1
      %p80 = por %p78, %p79
      %p81 = scmp.ne.s32.totalorder %s70, %s71
      %p82 = scmp.eq.s32.totalorder %s22, 0
      %p83 = por %p81, %p82
      %p84 = scmp.ne.s32.totalorder %s70, %s71
      %p85 = scmp.eq.s32.totalorder %s23, 1
      %p86 = por %p84, %p85
      %p88 = scmp.ne.s32.totalorder %s71, %s87
      %p89 = scmp.eq.s32.totalorder %s23, 0
      %p90 = por %p88, %p89
      %s91 = ssub.s32 %s24, %s36
      %s92 = ssub.s32 %s25, %s32
      %s93 = sor.u32 %s91, %s92
      %p94 = scmp.eq.s32.totalorder %s93, 0
      %s96 = sadd.s32 %s95, 1
      %s97 = scalar_select %p94, %s95, %s96
      %p100 = pneg %p94
      %p101 = scmp.eq.s32.totalorder %s17, 1
      %p102 = por %p100, %p101
      %p103 = scmp.ne.s32.totalorder %s95, %s98
      %p104 = scmp.eq.s32.totalorder %s17, 0
      %p105 = por %p103, %p104
      %p106 = scmp.ne.s32.totalorder %s95, %s98
      %p107 = scmp.eq.s32.totalorder %s22, 1
      %p108 = por %p106, %p107
      %p109 = scmp.ne.s32.totalorder %s98, %s99
      %p110 = scmp.eq.s32.totalorder %s22, 0
      %p111 = por %p109, %p110
      %p112 = scmp.ne.s32.totalorder %s98, %s99
      %p113 = scmp.eq.s32.totalorder %s23, 1
      %p114 = por %p112, %p113
      %p116 = scmp.ne.s32.totalorder %s99, %s115
      %p117 = scmp.eq.s32.totalorder %s23, 0
      %p118 = por %p116, %p117
      %p119 = scmp.le.s32.totalorder 1, %s17
      %p120 = scmp.lt.s32.totalorder %s17, 3
      %p121 = pnand %p119, %p120
      %p122 = pneg %p121
      // Predicated region
      $region9: #{tpu_custom_call.1} parent=5 // pred_check
        _
      $region10: #{tpu_custom_call.1} parent=5 // pred_check_branch
        %124 = sbr.rel (%p121) target = $region12
      $region11: #{tpu_custom_call.1} parent=5 // pred_region
        %s125 = ssub.s32 %s17, 1
      $region12: #{tpu_custom_call.1} parent=5 // pred_fallthru
        _
      %p126 = scmp.lt.s32.totalorder %s17, 2
      // Predicated region
      $region13: #{tpu_custom_call.1} parent=5 // pred_check
        %p127 = pneg %p126
      $region14: #{tpu_custom_call.1} parent=5 // pred_check_branch
        %129 = sbr.rel (%p127) target = $region16
      $region15: #{tpu_custom_call.1} parent=5 // pred_region
        // Predicated region
        $region17: #{tpu_custom_call.1} parent=15 // pred_check
          %p130 = pneg %p49
        $region18: #{tpu_custom_call.1} parent=15 // pred_check_branch
          %132 = sbr.rel (%p130) target = $region20
        $region19: #{tpu_custom_call.1} parent=15 // pred_region
          %s133 = sand.u32 %s39, 1
          %s134 = scalar_lea.sflag [#allocation3], %s133
          %s135 = sand.u32 %s39, 1
          %s136 = smul.addr %s135, 2
          %s137 = scalar_lea.vmem [#allocation2], %s136
          %s139 = ssub.s32 32, 32
          %140 = vsyncadd %s134, %s139
          %s141 = smul.addr %s24, 32
          %s142 = scalar_lea.hbm %s0, %s141
          %s144 = sshll.u32 %s137, 4
          %s145 = int_to_ptr.vmem [resolvable:$true] %s144
          %147 = dma.hbm_to_vmem [thread:$0]  %s142, 32, %s145, %s134
        $region20: #{tpu_custom_call.1} parent=15 // pred_fallthru
          _
        // Predicated region
        $region21: #{tpu_custom_call.1} parent=15 // pred_check
          %p148 = pneg %p77
        $region22: #{tpu_custom_call.1} parent=15 // pred_check_branch
          %150 = sbr.rel (%p148) target = $region24
        $region23: #{tpu_custom_call.1} parent=15 // pred_region
          %s151 = sand.u32 %s67, 1
          %s152 = scalar_lea.sflag [#allocation6], %s151
          %s153 = sand.u32 %s67, 1
          %s154 = smul.addr %s153, 8
          %s155 = scalar_lea.vmem [#allocation5], %s154
          %s157 = ssub.s32 128, 128
          %158 = vsyncadd %s152, %s157
          %s159 = sadd.s32 %s25, %s24
          %s160 = smul.addr %s159, 128
          %s161 = scalar_lea.hbm %s1, %s160
          %s163 = sshll.u32 %s155, 4
          %s164 = int_to_ptr.vmem [resolvable:$true] %s163
          %166 = dma.hbm_to_vmem [thread:$0]  %s161, 128, %s164, %s152
        $region24: #{tpu_custom_call.1} parent=15 // pred_fallthru
          _
      $region16: #{tpu_custom_call.1} parent=5 // pred_fallthru
        _
      %p167 = scmp.le.s32.totalorder 1, %s17
      %p168 = scmp.lt.s32.totalorder %s17, 3
      %p169 = pnand %p167, %p168
      %p170 = pneg %p169
      // Predicated region
      $region25: #{tpu_custom_call.1} parent=5 // pred_check
        _
      $region26: #{tpu_custom_call.1} parent=5 // pred_check_branch
        %172 = sbr.rel (%p169) target = $region28
      $region27: #{tpu_custom_call.1} parent=5 // pred_region
        %s173 = ssub.s32 %s17, 1
        %s174 = sand.u32 %s42, 1
        %s175 = scalar_lea.sflag [#allocation3], %s174
        %s176 = sand.u32 %s42, 1
        %s177 = smul.addr %s176, 2
        %s178 = scalar_lea.vmem [#allocation2], %s177
        // Predicated region
        $region29: #{tpu_custom_call.1} parent=27 // pred_check
          %p179 = pneg %p55
        $region30: #{tpu_custom_call.1} parent=27 // pred_check_branch
          %181 = sbr.rel (%p179) target = $region32
        $region31: #{tpu_custom_call.1} parent=27 // pred_region
          %182 = dma.done %s175, 32
        $region32: #{tpu_custom_call.1} parent=27 // pred_fallthru
          _
        %s183 = sand.u32 %s70, 1
        %s184 = scalar_lea.sflag [#allocation6], %s183
        %s185 = sand.u32 %s70, 1
        %s186 = smul.addr %s185, 8
        %s187 = scalar_lea.vmem [#allocation5], %s186
        // Predicated region
        $region33: #{tpu_custom_call.1} parent=27 // pred_check
          %p188 = pneg %p83
        $region34: #{tpu_custom_call.1} parent=27 // pred_check_branch
          %190 = sbr.rel (%p188) target = $region36
        $region35: #{tpu_custom_call.1} parent=27 // pred_region
          %191 = dma.done %s184, 128
        $region36: #{tpu_custom_call.1} parent=27 // pred_fallthru
          _
        %s192 = sand.u32 %s42, 1
        %s193 = scalar_lea.sflag [#allocation3], %s192
        %s194 = sand.u32 %s42, 1
        %s195 = smul.addr %s194, 2
        %s196 = scalar_lea.vmem [#allocation2], %s195
        %p197 = pneg %p55
        %p198 = pneg %p52
        %s199 = sand.u32 %s70, 1
        %s200 = scalar_lea.sflag [#allocation6], %s199
        %s201 = sand.u32 %s70, 1
        %s202 = smul.addr %s201, 8
        %s203 = scalar_lea.vmem [#allocation5], %s202
        %p204 = pneg %p83
        %p205 = pneg %p80
        %p206 = pneg %p111
        %p207 = pneg %p108
        %s208 = sand.u32 %s98, 1
        %s209 = scalar_lea.sflag [#allocation4], %s208
        %s210 = sand.u32 %s98, 1
        %s211 = smul.addr %s210, 8
        %s212 = scalar_lea.vmem [#allocation7], %s211
        %v213 = vld [vmem:[%s178] sm:$0x3]
        %v214 = vld [vmem:[%s187] sm:$0xff]
        %215 = vadd.xlane.f32.xlu0 %v214
        %v216 = vpop.xlane.xlu0 %215
        %v217 = vmul.f32 %v216, 0.0078125
        %v218 = vsub.f32 %v214, %v217
        %v219 = vmul.f32 %v218, %v218
        %220 = vadd.xlane.f32.xlu0 %v219
        %v221 = vpop.xlane.xlu0 %220
        %v222 = vmul.f32 %v221, 0.0078125
        %v223 = vadd.f32 %v222, 1e-05
        %v224 = vrsqrt.pop %v223
        %v225 = vlaneseq
        %v226 = vshrl.u32 %v225, 7
        %v227 = vsub.s32 0, %v226
        %v228 = vrot.slane %v213, %v227
        %v229 = vmul.f32 %v224, %v228
        %v230 = vmul.f32 %v218, %v229
        %v231 = vlaneseq
        %v232 = vshrl.u32 %v231, 7
        %v233 = vsub.s32 1, %v232
        %v234 = vrot.slane %v213, %v233
        %v235 = vadd.f32 %v230, %v234
        %236 = vst [vmem:[%s212] sm:$0xff] %v235
        %s237 = sand.u32 %s98, 1
        %s238 = scalar_lea.sflag [#allocation4], %s237
        %s239 = sand.u32 %s98, 1
        %s240 = smul.addr %s239, 8
        %s241 = scalar_lea.vmem [#allocation7], %s240
        // Predicated region
        $region37: #{tpu_custom_call.1} parent=27 // pred_check
          %p242 = pneg %p108
        $region38: #{tpu_custom_call.1} parent=27 // pred_check_branch
          %244 = sbr.rel (%p242) target = $region40
        $region39: #{tpu_custom_call.1} parent=27 // pred_region
          %s246 = ssub.s32 128, 128
          %247 = vsyncadd %s238, %s246
          %s248 = sadd.s32 %s27, %s26
          %s249 = smul.addr %s248, 128
          %s250 = scalar_lea.hbm %s2, %s249
          %s252 = sshll.u32 %s241, 4
          %s253 = int_to_ptr.vmem [resolvable:$true] %s252
          %255 = dma.vmem_to_hbm [thread:$0]  %s253, 128, %s250, %s238
        $region40: #{tpu_custom_call.1} parent=27 // pred_fallthru
          _
      $region28: #{tpu_custom_call.1} parent=5 // pred_fallthru
        _
      %p256 = scmp.le.s32.totalorder 2, %s17
      // Predicated region
      $region41: #{tpu_custom_call.1} parent=5 // pred_check
        %p257 = pneg %p256
      $region42: #{tpu_custom_call.1} parent=5 // pred_check_branch
        %259 = sbr.rel (%p257) target = $region44
      $region43: #{tpu_custom_call.1} parent=5 // pred_region
        %s260 = ssub.s32 %s17, 2
        // Predicated region
        $region45: #{tpu_custom_call.1} parent=43 // pred_check
          %p261 = pneg %p114
        $region46: #{tpu_custom_call.1} parent=43 // pred_check_branch
          %263 = sbr.rel (%p261) target = $region48
        $region47: #{tpu_custom_call.1} parent=43 // pred_region
          %s264 = sand.u32 %s99, 1
          %s265 = scalar_lea.sflag [#allocation4], %s264
          %s266 = sand.u32 %s99, 1
          %s267 = smul.addr %s266, 8
          %s268 = scalar_lea.vmem [#allocation7], %s267
          %269 = dma.done %s265, 128
        $region48: #{tpu_custom_call.1} parent=43 // pred_fallthru
          _
      $region44: #{tpu_custom_call.1} parent=5 // pred_fallthru
        _
    $region6: #{tpu_custom_call.1} parent=1 // loop_footer
      %s21 = sadd.s32 1, %s17
    $region7: #{tpu_custom_call.1} parent=1 // loop_footer_branch
      %16 = sbr.rel target = $region3
    $region8: #{tpu_custom_call.1} parent=1 // loop_exit
      _
    %270 = vsyncpa [#allocation3], 1
    %s271 = scalar_lea.sflag [#allocation3], 1
    %272 = vsyncpa %s271, 1
    %273 = vsyncpa [#allocation6], 1
    %s274 = scalar_lea.sflag [#allocation6], 1
    %275 = vsyncpa %s274, 1
    %276 = vsyncpa [#allocation4], 1
    %s277 = scalar_lea.sflag [#allocation4], 1
    %278 = vsyncpa %s277, 1

</llo_original>
